<compile_context>
chip_gen: v7x
topology: tpu7x:2x2x1
jax: 0.10.0
libtpu: 0.0.40
codegen_flags: <defaults>
</compile_context>

<pallas_src>
import functools

import jax
import jax.numpy as jnp
from jax.experimental import pallas as pl
from jax.experimental.pallas import tpu as pltpu


_NUM_COLS = 8      # columns 0..4 = Sx, Sy, Sxx, Syy, Sxy ; 5..7 unused (zero)
_ROW_CHUNK = 32    # rows per register-resident accumulator chunk
                   # (5 accumulators x (32,128) f32 = 20 vregs -> fits in 64)
_STEP_OVERHEAD = 512  # ~0.35 us per-step pipeline overhead expressed as
                      # "equivalent elements"; biases tile search to fewer steps


def _moments_kernel(x_ref, y_ref, out_ref, acc_ref):
    """Accumulate per-row, per-lane raw moments over the T ('arbitrary') axis."""
    t = pl.program_id(2)

    @pl.when(t == 0)
    def _init():
        acc_ref[...] = jnp.zeros_like(acc_ref)

    tb, tt = x_ref.shape
    n_groups = tt // 128

    # Lane-dense accumulation: only full-lane VPU adds per step (no XLU, no
    # masked narrow stores).  Rows are processed in small chunks so the five
    # partial-sum accumulators stay register-resident across the lane groups.
    for r in range(0, tb, _ROW_CHUNK):
        rows = min(_ROW_CHUNK, tb - r)
        sx = jnp.zeros((rows, 128), jnp.float32)
        sy = jnp.zeros((rows, 128), jnp.float32)
        sxx = jnp.zeros((rows, 128), jnp.float32)
        syy = jnp.zeros((rows, 128), jnp.float32)
        sxy = jnp.zeros((rows, 128), jnp.float32)
        for g in range(n_groups):
            xg = x_ref[r:r + rows, g * 128:(g + 1) * 128].astype(jnp.float32)
            yg = y_ref[r:r + rows, g * 128:(g + 1) * 128].astype(jnp.float32)
            sx = sx + xg
            sy = sy + yg
            sxx = sxx + xg * xg
            syy = syy + yg * yg
            sxy = sxy + xg * yg
        acc_ref[0, r:r + rows, :] += sx
        acc_ref[1, r:r + rows, :] += sy
        acc_ref[2, r:r + rows, :] += sxx
        acc_ref[3, r:r + rows, :] += syy
        acc_ref[4, r:r + rows, :] += sxy

    # Cross-lane reductions + narrow (TB, 8) store happen once per batch tile.
    @pl.when(t == pl.num_programs(2) - 1)
    def _finalize():
        out_ref[...] = jnp.zeros_like(out_ref)
        for i in range(5):
            out_ref[:, i:i + 1] = jnp.sum(acc_ref[i], axis=1, keepdims=True)


def _round_up(x, m):
    return (x + m - 1) // m * m


def _choose_tile(dim, max_tile, align, floor):
    """Tile size (multiple of `align`, in [floor, max_tile]) for one axis.

    A dim that fits a single tile gets exactly one (rounded to align).  Larger
    dims pick the candidate minimizing padded traffic + per-step pipeline
    overhead, never dropping below `floor` (prevents the old heuristic from
    collapsing the T tile to 128 on awkward sizes).
    """
    if dim <= max_tile:
        return _round_up(dim, align)
    floor = max(align, min(floor, max_tile))
    best_t, best_cost = max_tile, None
    max_steps = -(-dim // floor)
    for steps in range(1, max_steps + 1):
        t = max(_round_up(-(-dim // steps), align), floor)
        if t > max_tile:
            continue
        n = -(-dim // t)
        cost = n * (t + _STEP_OVERHEAD)
        if best_cost is None or cost < best_cost:
            best_t, best_cost = t, cost
    return best_t


@functools.partial(jax.jit, static_argnames=("tb", "tt"))
def neg_pearson_loss(X, Y, *, tb=256, tt=4096):
    assert X.shape == Y.shape and X.ndim == 2
    B, T = X.shape

    # 16-row alignment keeps bf16 inputs on native (16, 128) tiles.
    TB = _choose_tile(B, tb, 16, 64)
    TT = _choose_tile(T, tt, 128, 1024)
    Bp = _round_up(B, TB)
    n_btiles = Bp // TB

    # Engage a second "parallel" grid axis over halves of T when there is a
    # single batch tile and the split costs no extra padding: on v7x this lets
    # the second TensorCore work on small-B inputs; on v5e/v6e it is a no-op.
    n_ttiles = -(-T // TT)
    split = 2 if (n_btiles < 2 and n_ttiles >= 2
                  and _round_up(T, 2 * TT) == _round_up(T, TT)) else 1
    Tp = _round_up(T, TT * split)
    tps = Tp // (TT * split)          # T tiles per split

    if (Bp, Tp) != (B, T):
        # Zero padding is exact for the raw moments; padded rows dropped below.
        X = jnp.pad(X, ((0, Bp - B), (0, Tp - T)))
        Y = jnp.pad(Y, ((0, Bp - B), (0, Tp - T)))

    moments = pl.pallas_call(
        _moments_kernel,
        out_shape=jax.ShapeDtypeStruct((split, Bp, _NUM_COLS), jnp.float32),
        grid_spec=pltpu.PrefetchScalarGridSpec(
            num_scalar_prefetch=0,
            grid=(split, n_btiles, tps),
            in_specs=[
                pl.BlockSpec((TB, TT), lambda s, b, t: (b, s * tps + t)),
                pl.BlockSpec((TB, TT), lambda s, b, t: (b, s * tps + t)),
            ],
            # Output block constant over t -> resident per (split, batch tile).
            out_specs=pl.BlockSpec((None, TB, _NUM_COLS),
                                   lambda s, b, t: (s, b, 0)),
            scratch_shapes=[pltpu.VMEM((5, TB, 128), jnp.float32)],
        ),
        compiler_params=pltpu.CompilerParams(
            dimension_semantics=("parallel", "parallel", "arbitrary"),
            vmem_limit_bytes=40 << 20,
        ),
    )(X, Y)

    # --- finalize in plain JAX (a few hundred floats; effectively free) ---
    m = jnp.sum(moments, axis=0)[:B]      # sum T-split halves, drop padded rows
    Tf = jnp.float32(T)
    sx, sy = m[:, 0], m[:, 1]
    sxx, syy, sxy = m[:, 2], m[:, 3], m[:, 4]

    # Sums of squared / cross deviations (guard tiny negatives from f32
    # cancellation in the raw-moment form).
    css_x = jnp.maximum(sxx - sx * sx / Tf, 0.0)
    css_y = jnp.maximum(syy - sy * sy / Tf, 0.0)
    cross = sxy - sx * sy / Tf

    # torch.std default: unbiased (ddof = 1); eps added to std (not variance).
    std_x = jnp.sqrt(css_x / (Tf - 1.0))
    std_y = jnp.sqrt(css_y / (Tf - 1.0))

    corr = cross / ((std_x + 1e-5) * (std_y + 1e-5)) / Tf
    return 1.0 - jnp.mean(corr)


def _reference(X, Y):
    """Pure-jnp mirror of the PyTorch module."""
    T = X.shape[1]
    Xc = X - X.mean(axis=1, keepdims=True)
    Yc = Y - Y.mean(axis=1, keepdims=True)
    Xn = Xc / (jnp.std(X, axis=1, ddof=1, keepdims=True) + 1e-5)
    Yn = Yc / (jnp.std(Y, axis=1, ddof=1, keepdims=True) + 1e-5)
    corr = jnp.sum(Xn * Yn, axis=1) / T
    return 1.0 - corr.mean()


if __name__ == "__main__":
    key = jax.random.PRNGKey(0)
    k1, k2, k3, k4 = jax.random.split(key, 4)

    # Case 1: awkward shapes (padding on both axes).
    B, T = 10, 300
    X = jax.random.normal(k1, (B, T), dtype=jnp.float32)
    Y = 0.5 * X + 0.5 * jax.random.normal(k2, (B, T), dtype=jnp.float32)
    loss_default = neg_pearson_loss(X, Y)                 # single-tile path
    loss_tiled = neg_pearson_loss(X, Y, tb=16, tt=128)    # multi T-tile accumulation
    ref1 = _reference(X, Y)

    # Case 2: small B, longer T with small tiles -> exercises the T-split
    # (second-TensorCore) parallel axis.
    B2, T2 = 4, 1024
    X2 = jax.random.normal(k3, (B2, T2), dtype=jnp.float32)
    Y2 = 0.3 * X2 + jax.random.normal(k4, (B2, T2), dtype=jnp.float32)
    loss_split = neg_pearson_loss(X2, Y2, tb=16, tt=128)
    ref2 = _reference(X2, Y2)

    jax.block_until_ready((loss_default, loss_tiled, loss_split))

    assert jnp.allclose(loss_default, ref1, atol=2e-4, rtol=2e-4), (loss_default, ref1)
    assert jnp.allclose(loss_tiled, ref1, atol=2e-4, rtol=2e-4), (loss_tiled, ref1)
    assert jnp.allclose(loss_split, ref2, atol=2e-4, rtol=2e-4), (loss_split, ref2)
    print("KERNEL_OK")
</pallas_src>

<mosaic_0001>
module attributes {stable_mosaic.version = 11 : i64} {
  func.func @_moments_kernel(%arg0: i32, %arg1: i32, %arg2: i32, %arg3: memref<16x384xf32, #tpu.memory_space<vmem>>, %arg4: memref<16x384xf32, #tpu.memory_space<vmem>>, %arg5: memref<1x16x8xf32, #tpu.memory_space<vmem>>, %arg6: memref<5x16x128xf32, #tpu.memory_space<vmem>>) attributes {dimension_semantics = [#tpu.dimension_semantics<parallel>, #tpu.dimension_semantics<parallel>, #tpu.dimension_semantics<arbitrary>], iteration_bounds = array<i64: 1, 1, 1>, scalar_prefetch = 0 : i64, scratch_operands = 1 : i64, tpu.core_type = #tpu.core_type<tc>, window_params = [{transform_indices = @transform_0, window_bounds = array<i64: 16, 384>}, {transform_indices = @transform_1, window_bounds = array<i64: 16, 384>}, {transform_indices = @transform_2, window_bounds = array<i64: 1, 16, 8>}]} {
    %c0_i32 = arith.constant 0 : i32
    %0 = arith.cmpi eq, %arg2, %c0_i32 : i32
    %1 = arith.extui %0 : i1 to i32
    %c0_i32_0 = arith.constant 0 : i32
    %2 = arith.cmpi ne, %1, %c0_i32_0 : i32
    scf.if %2 {
      %cst_42 = arith.constant 0.000000e+00 : f32
      %71 = vector.broadcast %cst_42 : f32 to vector<5x16x128xf32>
      %c0_43 = arith.constant 0 : index
      %c0_44 = arith.constant 0 : index
      %c0_45 = arith.constant 0 : index
      %72 = vector.load %arg6[%c0_43, %c0_44, %c0_45] : memref<5x16x128xf32, #tpu.memory_space<vmem>>, vector<5x16x128xf32>
      tpu.vector_store %arg6[%c0_43, %c0_44, %c0_45], %71 {strides = array<i32>} : memref<5x16x128xf32, #tpu.memory_space<vmem>>, vector<5x16x128xf32>,
    } else {
    }
    %cst = arith.constant 0.000000e+00 : f32
    %3 = vector.broadcast %cst : f32 to vector<16x128xf32>
    %cst_1 = arith.constant 0.000000e+00 : f32
    %4 = vector.broadcast %cst_1 : f32 to vector<16x128xf32>
    %cst_2 = arith.constant 0.000000e+00 : f32
    %5 = vector.broadcast %cst_2 : f32 to vector<16x128xf32>
    %cst_3 = arith.constant 0.000000e+00 : f32
    %6 = vector.broadcast %cst_3 : f32 to vector<16x128xf32>
    %cst_4 = arith.constant 0.000000e+00 : f32
    %7 = vector.broadcast %cst_4 : f32 to vector<16x128xf32>
    %c0 = arith.constant 0 : index
    %c0_5 = arith.constant 0 : index
    %8 = vector.load %arg3[%c0, %c0_5] : memref<16x384xf32, #tpu.memory_space<vmem>>, vector<16x128xf32>
    %c0_6 = arith.constant 0 : index
    %c0_7 = arith.constant 0 : index
    %9 = vector.load %arg4[%c0_6, %c0_7] : memref<16x384xf32, #tpu.memory_space<vmem>>, vector<16x128xf32>
    %10 = arith.addf %3, %8 : vector<16x128xf32>
    %11 = arith.addf %4, %9 : vector<16x128xf32>
    %12 = arith.mulf %8, %8 : vector<16x128xf32>
    %13 = arith.addf %5, %12 : vector<16x128xf32>
    %14 = arith.mulf %9, %9 : vector<16x128xf32>
    %15 = arith.addf %6, %14 : vector<16x128xf32>
    %16 = arith.mulf %8, %9 : vector<16x128xf32>
    %17 = arith.addf %7, %16 : vector<16x128xf32>
    %c0_8 = arith.constant 0 : index
    %c128 = arith.constant 128 : index
    %18 = vector.load %arg3[%c0_8, %c128] : memref<16x384xf32, #tpu.memory_space<vmem>>, vector<16x128xf32>
    %c0_9 = arith.constant 0 : index
    %c128_10 = arith.constant 128 : index
    %19 = vector.load %arg4[%c0_9, %c128_10] : memref<16x384xf32, #tpu.memory_space<vmem>>, vector<16x128xf32>
    %20 = arith.addf %10, %18 : vector<16x128xf32>
    %21 = arith.addf %11, %19 : vector<16x128xf32>
    %22 = arith.mulf %18, %18 : vector<16x128xf32>
    %23 = arith.addf %13, %22 : vector<16x128xf32>
    %24 = arith.mulf %19, %19 : vector<16x128xf32>
    %25 = arith.addf %15, %24 : vector<16x128xf32>
    %26 = arith.mulf %18, %19 : vector<16x128xf32>
    %27 = arith.addf %17, %26 : vector<16x128xf32>
    %c0_11 = arith.constant 0 : index
    %c256 = arith.constant 256 : index
    %28 = vector.load %arg3[%c0_11, %c256] : memref<16x384xf32, #tpu.memory_space<vmem>>, vector<16x128xf32>
    %c0_12 = arith.constant 0 : index
    %c256_13 = arith.constant 256 : index
    %29 = vector.load %arg4[%c0_12, %c256_13] : memref<16x384xf32, #tpu.memory_space<vmem>>, vector<16x128xf32>
    %30 = arith.addf %20, %28 : vector<16x128xf32>
    %31 = arith.addf %21, %29 : vector<16x128xf32>
    %32 = arith.mulf %28, %28 : vector<16x128xf32>
    %33 = arith.addf %23, %32 : vector<16x128xf32>
    %34 = arith.mulf %29, %29 : vector<16x128xf32>
    %35 = arith.addf %25, %34 : vector<16x128xf32>
    %36 = arith.mulf %28, %29 : vector<16x128xf32>
    %37 = arith.addf %27, %36 : vector<16x128xf32>
    %c0_14 = arith.constant 0 : index
    %c0_15 = arith.constant 0 : index
    %c0_16 = arith.constant 0 : index
    %38 = vector.load %arg6[%c0_14, %c0_15, %c0_16] : memref<5x16x128xf32, #tpu.memory_space<vmem>>, vector<1x16x128xf32>
    %39 = vector.shape_cast %38 : vector<1x16x128xf32> to vector<16x128xf32>
    %40 = arith.addf %39, %30 : vector<16x128xf32>
    %c0_17 = arith.constant 0 : index
    %c0_18 = arith.constant 0 : index
    %c0_19 = arith.constant 0 : index
    %41 = vector.load %arg6[%c0_17, %c0_18, %c0_19] : memref<5x16x128xf32, #tpu.memory_space<vmem>>, vector<1x16x128xf32>
    %42 = vector.shape_cast %41 : vector<1x16x128xf32> to vector<16x128xf32>
    %43 = vector.shape_cast %40 : vector<16x128xf32> to vector<1x16x128xf32>
    tpu.vector_store %arg6[%c0_17, %c0_18, %c0_19], %43 {strides = array<i32>} : memref<5x16x128xf32, #tpu.memory_space<vmem>>, vector<1x16x128xf32>,
    %c1 = arith.constant 1 : index
    %c0_20 = arith.constant 0 : index
    %c0_21 = arith.constant 0 : index
    %44 = vector.load %arg6[%c1, %c0_20, %c0_21] : memref<5x16x128xf32, #tpu.memory_space<vmem>>, vector<1x16x128xf32>
    %45 = vector.shape_cast %44 : vector<1x16x128xf32> to vector<16x128xf32>
    %46 = arith.addf %45, %31 : vector<16x128xf32>
    %c1_22 = arith.constant 1 : index
    %c0_23 = arith.constant 0 : index
    %c0_24 = arith.constant 0 : index
    %47 = vector.load %arg6[%c1_22, %c0_23, %c0_24] : memref<5x16x128xf32, #tpu.memory_space<vmem>>, vector<1x16x128xf32>
    %48 = vector.shape_cast %47 : vector<1x16x128xf32> to vector<16x128xf32>
    %49 = vector.shape_cast %46 : vector<16x128xf32> to vector<1x16x128xf32>
    tpu.vector_store %arg6[%c1_22, %c0_23, %c0_24], %49 {strides = array<i32>} : memref<5x16x128xf32, #tpu.memory_space<vmem>>, vector<1x16x128xf32>,
    %c2 = arith.constant 2 : index
    %c0_25 = arith.constant 0 : index
    %c0_26 = arith.constant 0 : index
    %50 = vector.load %arg6[%c2, %c0_25, %c0_26] : memref<5x16x128xf32, #tpu.memory_space<vmem>>, vector<1x16x128xf32>
    %51 = vector.shape_cast %50 : vector<1x16x128xf32> to vector<16x128xf32>
    %52 = arith.addf %51, %33 : vector<16x128xf32>
    %c2_27 = arith.constant 2 : index
    %c0_28 = arith.constant 0 : index
    %c0_29 = arith.constant 0 : index
    %53 = vector.load %arg6[%c2_27, %c0_28, %c0_29] : memref<5x16x128xf32, #tpu.memory_space<vmem>>, vector<1x16x128xf32>
    %54 = vector.shape_cast %53 : vector<1x16x128xf32> to vector<16x128xf32>
    %55 = vector.shape_cast %52 : vector<16x128xf32> to vector<1x16x128xf32>
    tpu.vector_store %arg6[%c2_27, %c0_28, %c0_29], %55 {strides = array<i32>} : memref<5x16x128xf32, #tpu.memory_space<vmem>>, vector<1x16x128xf32>,
    %c3 = arith.constant 3 : index
    %c0_30 = arith.constant 0 : index
    %c0_31 = arith.constant 0 : index
    %56 = vector.load %arg6[%c3, %c0_30, %c0_31] : memref<5x16x128xf32, #tpu.memory_space<vmem>>, vector<1x16x128xf32>
    %57 = vector.shape_cast %56 : vector<1x16x128xf32> to vector<16x128xf32>
    %58 = arith.addf %57, %35 : vector<16x128xf32>
    %c3_32 = arith.constant 3 : index
    %c0_33 = arith.constant 0 : index
    %c0_34 = arith.constant 0 : index
    %59 = vector.load %arg6[%c3_32, %c0_33, %c0_34] : memref<5x16x128xf32, #tpu.memory_space<vmem>>, vector<1x16x128xf32>
    %60 = vector.shape_cast %59 : vector<1x16x128xf32> to vector<16x128xf32>
    %61 = vector.shape_cast %58 : vector<16x128xf32> to vector<1x16x128xf32>
    tpu.vector_store %arg6[%c3_32, %c0_33, %c0_34], %61 {strides = array<i32>} : memref<5x16x128xf32, #tpu.memory_space<vmem>>, vector<1x16x128xf32>,
    %c4 = arith.constant 4 : index
    %c0_35 = arith.constant 0 : index
    %c0_36 = arith.constant 0 : index
    %62 = vector.load %arg6[%c4, %c0_35, %c0_36] : memref<5x16x128xf32, #tpu.memory_space<vmem>>, vector<1x16x128xf32>
    %63 = vector.shape_cast %62 : vector<1x16x128xf32> to vector<16x128xf32>
    %64 = arith.addf %63, %37 : vector<16x128xf32>
    %c4_37 = arith.constant 4 : index
    %c0_38 = arith.constant 0 : index
    %c0_39 = arith.constant 0 : index
    %65 = vector.load %arg6[%c4_37, %c0_38, %c0_39] : memref<5x16x128xf32, #tpu.memory_space<vmem>>, vector<1x16x128xf32>
    %66 = vector.shape_cast %65 : vector<1x16x128xf32> to vector<16x128xf32>
    %67 = vector.shape_cast %64 : vector<16x128xf32> to vector<1x16x128xf32>
    tpu.vector_store %arg6[%c4_37, %c0_38, %c0_39], %67 {strides = array<i32>} : memref<5x16x128xf32, #tpu.memory_space<vmem>>, vector<1x16x128xf32>,
    %c0_i32_40 = arith.constant 0 : i32
    %68 = arith.cmpi eq, %arg2, %c0_i32_40 : i32
    %69 = arith.extui %68 : i1 to i32
    %c0_i32_41 = arith.constant 0 : i32
    %70 = arith.cmpi ne, %69, %c0_i32_41 : i32
    scf.if %70 {
      %cst_42 = arith.constant 0.000000e+00 : f32
      %71 = vector.broadcast %cst_42 : f32 to vector<16x8xf32>
      %c0_43 = arith.constant 0 : index
      %c0_44 = arith.constant 0 : index
      %c0_45 = arith.constant 0 : index
      %72 = vector.load %arg5[%c0_43, %c0_44, %c0_45] : memref<1x16x8xf32, #tpu.memory_space<vmem>>, vector<1x16x8xf32>
      %73 = vector.shape_cast %72 : vector<1x16x8xf32> to vector<16x8xf32>
      %74 = vector.shape_cast %71 : vector<16x8xf32> to vector<1x16x8xf32>
      tpu.vector_store %arg5[%c0_43, %c0_44, %c0_45], %74 {strides = array<i32>} : memref<1x16x8xf32, #tpu.memory_space<vmem>>, vector<1x16x8xf32>,
      %c0_46 = arith.constant 0 : index
      %c0_47 = arith.constant 0 : index
      %c0_48 = arith.constant 0 : index
      %75 = vector.load %arg6[%c0_46, %c0_47, %c0_48] : memref<5x16x128xf32, #tpu.memory_space<vmem>>, vector<1x16x128xf32>
      %76 = vector.shape_cast %75 : vector<1x16x128xf32> to vector<16x128xf32>
      %cst_49 = arith.constant dense<0.000000e+00> : vector<16xf32>
      %77 = vector.multi_reduction <add>, %76, %cst_49 [1] : vector<16x128xf32> to vector<16xf32>
      %78 = vector.shape_cast %77 : vector<16xf32> to vector<16x1xf32>
      %c0_50 = arith.constant 0 : index
      %c0_51 = arith.constant 0 : index
      %c0_52 = arith.constant 0 : index
      %79 = vector.load %arg5[%c0_50, %c0_51, %c0_52] : memref<1x16x8xf32, #tpu.memory_space<vmem>>, vector<1x16x1xf32>
      %80 = vector.shape_cast %79 : vector<1x16x1xf32> to vector<16x1xf32>
      %81 = vector.shape_cast %78 : vector<16x1xf32> to vector<1x16x1xf32>
      tpu.vector_store %arg5[%c0_50, %c0_51, %c0_52], %81 {strides = array<i32>} : memref<1x16x8xf32, #tpu.memory_space<vmem>>, vector<1x16x1xf32>,
      %c1_53 = arith.constant 1 : index
      %c0_54 = arith.constant 0 : index
      %c0_55 = arith.constant 0 : index
      %82 = vector.load %arg6[%c1_53, %c0_54, %c0_55] : memref<5x16x128xf32, #tpu.memory_space<vmem>>, vector<1x16x128xf32>
      %83 = vector.shape_cast %82 : vector<1x16x128xf32> to vector<16x128xf32>
      %cst_56 = arith.constant dense<0.000000e+00> : vector<16xf32>
      %84 = vector.multi_reduction <add>, %83, %cst_56 [1] : vector<16x128xf32> to vector<16xf32>
      %85 = vector.shape_cast %84 : vector<16xf32> to vector<16x1xf32>
      %c0_57 = arith.constant 0 : index
      %c0_58 = arith.constant 0 : index
      %c1_59 = arith.constant 1 : index
      %86 = vector.load %arg5[%c0_57, %c0_58, %c1_59] : memref<1x16x8xf32, #tpu.memory_space<vmem>>, vector<1x16x1xf32>
      %87 = vector.shape_cast %86 : vector<1x16x1xf32> to vector<16x1xf32>
      %88 = vector.shape_cast %85 : vector<16x1xf32> to vector<1x16x1xf32>
      tpu.vector_store %arg5[%c0_57, %c0_58, %c1_59], %88 {strides = array<i32>} : memref<1x16x8xf32, #tpu.memory_space<vmem>>, vector<1x16x1xf32>,
      %c2_60 = arith.constant 2 : index
      %c0_61 = arith.constant 0 : index
      %c0_62 = arith.constant 0 : index
      %89 = vector.load %arg6[%c2_60, %c0_61, %c0_62] : memref<5x16x128xf32, #tpu.memory_space<vmem>>, vector<1x16x128xf32>
      %90 = vector.shape_cast %89 : vector<1x16x128xf32> to vector<16x128xf32>
      %cst_63 = arith.constant dense<0.000000e+00> : vector<16xf32>
      %91 = vector.multi_reduction <add>, %90, %cst_63 [1] : vector<16x128xf32> to vector<16xf32>
      %92 = vector.shape_cast %91 : vector<16xf32> to vector<16x1xf32>
      %c0_64 = arith.constant 0 : index
      %c0_65 = arith.constant 0 : index
      %c2_66 = arith.constant 2 : index
      %93 = vector.load %arg5[%c0_64, %c0_65, %c2_66] : memref<1x16x8xf32, #tpu.memory_space<vmem>>, vector<1x16x1xf32>
      %94 = vector.shape_cast %93 : vector<1x16x1xf32> to vector<16x1xf32>
      %95 = vector.shape_cast %92 : vector<16x1xf32> to vector<1x16x1xf32>
      tpu.vector_store %arg5[%c0_64, %c0_65, %c2_66], %95 {strides = array<i32>} : memref<1x16x8xf32, #tpu.memory_space<vmem>>, vector<1x16x1xf32>,
      %c3_67 = arith.constant 3 : index
      %c0_68 = arith.constant 0 : index
      %c0_69 = arith.constant 0 : index
      %96 = vector.load %arg6[%c3_67, %c0_68, %c0_69] : memref<5x16x128xf32, #tpu.memory_space<vmem>>, vector<1x16x128xf32>
      %97 = vector.shape_cast %96 : vector<1x16x128xf32> to vector<16x128xf32>
      %cst_70 = arith.constant dense<0.000000e+00> : vector<16xf32>
      %98 = vector.multi_reduction <add>, %97, %cst_70 [1] : vector<16x128xf32> to vector<16xf32>
      %99 = vector.shape_cast %98 : vector<16xf32> to vector<16x1xf32>
      %c0_71 = arith.constant 0 : index
      %c0_72 = arith.constant 0 : index
      %c3_73 = arith.constant 3 : index
      %100 = vector.load %arg5[%c0_71, %c0_72, %c3_73] : memref<1x16x8xf32, #tpu.memory_space<vmem>>, vector<1x16x1xf32>
      %101 = vector.shape_cast %100 : vector<1x16x1xf32> to vector<16x1xf32>
      %102 = vector.shape_cast %99 : vector<16x1xf32> to vector<1x16x1xf32>
      tpu.vector_store %arg5[%c0_71, %c0_72, %c3_73], %102 {strides = array<i32>} : memref<1x16x8xf32, #tpu.memory_space<vmem>>, vector<1x16x1xf32>,
      %c4_74 = arith.constant 4 : index
      %c0_75 = arith.constant 0 : index
      %c0_76 = arith.constant 0 : index
      %103 = vector.load %arg6[%c4_74, %c0_75, %c0_76] : memref<5x16x128xf32, #tpu.memory_space<vmem>>, vector<1x16x128xf32>
      %104 = vector.shape_cast %103 : vector<1x16x128xf32> to vector<16x128xf32>
      %cst_77 = arith.constant dense<0.000000e+00> : vector<16xf32>
      %105 = vector.multi_reduction <add>, %104, %cst_77 [1] : vector<16x128xf32> to vector<16xf32>
      %106 = vector.shape_cast %105 : vector<16xf32> to vector<16x1xf32>
      %c0_78 = arith.constant 0 : index
      %c0_79 = arith.constant 0 : index
      %c4_80 = arith.constant 4 : index
      %107 = vector.load %arg5[%c0_78, %c0_79, %c4_80] : memref<1x16x8xf32, #tpu.memory_space<vmem>>, vector<1x16x1xf32>
      %108 = vector.shape_cast %107 : vector<1x16x1xf32> to vector<16x1xf32>
      %109 = vector.shape_cast %106 : vector<16x1xf32> to vector<1x16x1xf32>
      tpu.vector_store %arg5[%c0_78, %c0_79, %c4_80], %109 {strides = array<i32>} : memref<1x16x8xf32, #tpu.memory_space<vmem>>, vector<1x16x1xf32>,
    } else {
    }
    return
  }
  func.func @transform_0(%arg0: i32, %arg1: i32, %arg2: i32) -> (i32, i32) {
    %c1_i32 = arith.constant 1 : i32
    %0 = arith.muli %arg0, %c1_i32 : i32
    %1 = arith.addi %0, %arg2 : i32
    %c0_i32 = arith.constant 0 : i32
    return %arg1, %1 : i32, i32
  }
  func.func @transform_1(%arg0: i32, %arg1: i32, %arg2: i32) -> (i32, i32) {
    %c1_i32 = arith.constant 1 : i32
    %0 = arith.muli %arg0, %c1_i32 : i32
    %1 = arith.addi %0, %arg2 : i32
    %c0_i32 = arith.constant 0 : i32
    return %arg1, %1 : i32, i32
  }
  func.func @transform_2(%arg0: i32, %arg1: i32, %arg2: i32) -> (i32, i32, i32) {
    %c0_i32 = arith.constant 0 : i32
    %c0_i32_0 = arith.constant 0 : i32
    return %arg0, %arg1, %c0_i32 : i32, i32, i32
  }
}

</mosaic_0001>

<llo_original>
// kernel: neg_pearson_loss.1
$region0: #{neg_pearson_loss.1}
  #allocation0 [shape = 'u32[]', space=smem, size = 0x4, offset = 0x4, fixed_abs, tag = 'smem constant byte address 0x4 - core index']
  #allocation1 [shape = 'u32[144,128]{1,0:T(1,128)}', space=vmem, size = 0x12000, scoped, tag = 'internal scratch']
  #allocation2 [shape = 'f32[5,16,128]{2,1,0:T(8,128)}', space=vmem, size = 0xa000, scoped, tag = 'scratch operand']
  %s0 = inlined_call_operand.vmem [shape: f32[16,384], index: 0, kind: input, shape index: {}]
  %s1 = inlined_call_operand.vmem [shape: f32[16,384], index: 1, kind: input, shape index: {}]
  %s2 = inlined_call_operand.vmem [shape: f32[1,16,8], index: 2, kind: output, shape index: {}]
  %s3 = sld [smem:[#allocation0]]
  $region26: #{neg_pearson_loss.1} parent=0
    _
  %s5 = ssub.s32 1, %s3
  %s6 = scalar_select 0, %s5, %s3
  // Predicated region
  $region2: #{neg_pearson_loss.1} parent=0 // pred_check
    _
  $region3: #{neg_pearson_loss.1} parent=0 // pred_check_branch
    %8 = sbr.rel (0) target = $region5
  $region4: #{neg_pearson_loss.1} parent=0 // pred_region
    %s9 = sadd.s32 0, 0
    %s10 = smul.u32 3, %s9
    %p11 = scmp.lt.s32.totalorder %s10, 2
    %s12 = scalar_select %p11, %s10, 2
    %s13 = smul.addr %s12, 8
    %s14 = scalar_lea.vmem %s0, %s13
    %s15 = sadd.s32 0, 0
    %s16 = smul.u32 3, %s15
  $region5: #{neg_pearson_loss.1} parent=0 // pred_fallthru
    _
  // Predicated region
  $region6: #{neg_pearson_loss.1} parent=0 // pred_check
    _
  $region7: #{neg_pearson_loss.1} parent=0 // pred_check_branch
    %18 = sbr.rel (0) target = $region9
  $region8: #{neg_pearson_loss.1} parent=0 // pred_region
    %s19 = sadd.s32 0, 0
    %s20 = smul.u32 3, %s19
    %p21 = scmp.lt.s32.totalorder %s20, 2
    %s22 = scalar_select %p21, %s20, 2
    %s23 = smul.addr %s22, 8
    %s24 = scalar_lea.vmem %s1, %s23
    %s25 = sadd.s32 0, 0
    %s26 = smul.u32 3, %s25
  $region9: #{neg_pearson_loss.1} parent=0 // pred_fallthru
    _
  %s27 = sadd.s32 0, 0
  %s28 = smul.u32 3, %s27
  %p29 = scmp.lt.s32.totalorder %s28, 2
  %s30 = scalar_select %p29, %s28, 2
  %s31 = smul.addr %s30, 8
  %s32 = scalar_lea.vmem %s0, %s31
  %s33 = sadd.s32 0, 0
  %s34 = smul.u32 3, %s33
  %p35 = scmp.lt.s32.totalorder %s34, 2
  %s36 = scalar_select %p35, %s34, 2
  %s37 = smul.addr %s36, 8
  %s38 = scalar_lea.vmem %s1, %s37
  %s39 = sadd.s32 0, 0
  %s40 = smul.u32 3, %s39
  %p41 = scmp.lt.s32.totalorder %s40, 2
  %s42 = scalar_select %p41, %s40, 2
  %s43 = smul.addr %s42, 8
  %s44 = scalar_lea.vmem %s0, %s43
  %s45 = sadd.s32 0, 0
  %s46 = smul.u32 3, %s45
  %s47 = sadd.s32 0, 0
  %s48 = smul.u32 3, %s47
  %p49 = scmp.lt.s32.totalorder %s48, 2
  %s50 = scalar_select %p49, %s48, 2
  %s51 = smul.addr %s50, 8
  %s52 = scalar_lea.vmem %s1, %s51
  %s53 = sadd.s32 0, 0
  %s54 = smul.u32 3, %s53
  %p55 = scmp.eq.s32.totalorder 0, 0
  // Predicated region
  $region10: #{neg_pearson_loss.1} parent=0 // pred_check
    %p56 = pneg %p55
  $region11: #{neg_pearson_loss.1} parent=0 // pred_check_branch
    %58 = sbr.rel (%p56) target = $region13
  $region12: #{neg_pearson_loss.1} parent=0 // pred_region
    %59 = vst [vmem:[#allocation2] sm:$0xff] 0.0
    %60 = vst [vmem:[#allocation2 + $0x8] sm:$0xff] 0.0
    %61 = vst [vmem:[#allocation2 + $0x10] sm:$0xff] 0.0
    %62 = vst [vmem:[#allocation2 + $0x18] sm:$0xff] 0.0
    %63 = vst [vmem:[#allocation2 + $0x20] sm:$0xff] 0.0
    %64 = vst [vmem:[#allocation2 + $0x28] sm:$0xff] 0.0
    %65 = vst [vmem:[#allocation2 + $0x30] sm:$0xff] 0.0
    %66 = vst [vmem:[#allocation2 + $0x38] sm:$0xff] 0.0
    %67 = vst [vmem:[#allocation2 + $0x40] sm:$0xff] 0.0
    %68 = vst [vmem:[#allocation2 + $0x48] sm:$0xff] 0.0
  $region13: #{neg_pearson_loss.1} parent=0 // pred_fallthru
    _
  %v69 = vld [vmem:[%s44] sm:$0xff]
  %v70 = vld [vmem:[%s44 + $0x18] sm:$0xff]
  %v71 = vld [vmem:[%s52] sm:$0xff]
  %v72 = vld [vmem:[%s52 + $0x18] sm:$0xff]
  %v73 = vadd.f32 %v69, 0.0
  %v74 = vadd.f32 %v70, 0.0
  %v75 = vadd.f32 %v71, 0.0
  %v76 = vadd.f32 %v72, 0.0
  %v77 = vmul.f32 %v69, %v69
  %v78 = vmul.f32 %v70, %v70
  %v79 = vadd.f32 %v77, 0.0
  %v80 = vadd.f32 %v78, 0.0
  %v81 = vmul.f32 %v71, %v71
  %v82 = vmul.f32 %v72, %v72
  %v83 = vadd.f32 %v81, 0.0
  %v84 = vadd.f32 %v82, 0.0
  %v85 = vmul.f32 %v69, %v71
  %v86 = vmul.f32 %v70, %v72
  %v87 = vadd.f32 %v85, 0.0
  %v88 = vadd.f32 %v86, 0.0
  %v89 = vld [vmem:[%s44 + $0x8] sm:$0xff]
  %v90 = vld [vmem:[%s44 + $0x20] sm:$0xff]
  %v91 = vld [vmem:[%s52 + $0x8] sm:$0xff]
  %v92 = vld [vmem:[%s52 + $0x20] sm:$0xff]
  %v93 = vadd.f32 %v73, %v89
  %v94 = vadd.f32 %v74, %v90
  %v95 = vadd.f32 %v75, %v91
  %v96 = vadd.f32 %v76, %v92
  %v97 = vmul.f32 %v89, %v89
  %v98 = vmul.f32 %v90, %v90
  %v99 = vadd.f32 %v79, %v97
  %v100 = vadd.f32 %v80, %v98
  %v101 = vmul.f32 %v91, %v91
  %v102 = vmul.f32 %v92, %v92
  %v103 = vadd.f32 %v83, %v101
  %v104 = vadd.f32 %v84, %v102
  %v105 = vmul.f32 %v89, %v91
  %v106 = vmul.f32 %v90, %v92
  %v107 = vadd.f32 %v87, %v105
  %v108 = vadd.f32 %v88, %v106
  %v109 = vld [vmem:[%s44 + $0x10] sm:$0xff]
  %v110 = vld [vmem:[%s44 + $0x28] sm:$0xff]
  %v111 = vld [vmem:[%s52 + $0x10] sm:$0xff]
  %v112 = vld [vmem:[%s52 + $0x28] sm:$0xff]
  %v113 = vadd.f32 %v93, %v109
  %v114 = vadd.f32 %v94, %v110
  %v115 = vadd.f32 %v95, %v111
  %v116 = vadd.f32 %v96, %v112
  %v117 = vmul.f32 %v109, %v109
  %v118 = vmul.f32 %v110, %v110
  %v119 = vadd.f32 %v99, %v117
  %v120 = vadd.f32 %v100, %v118
  %v121 = vmul.f32 %v111, %v111
  %v122 = vmul.f32 %v112, %v112
  %v123 = vadd.f32 %v103, %v121
  %v124 = vadd.f32 %v104, %v122
  %v125 = vmul.f32 %v109, %v111
  %v126 = vmul.f32 %v110, %v112
  %v127 = vadd.f32 %v107, %v125
  %v128 = vadd.f32 %v108, %v126
  %v129 = vld [vmem:[#allocation2] sm:$0xff]
  %v130 = vld [vmem:[#allocation2 + $0x8] sm:$0xff]
  %v131 = vadd.f32 %v129, %v113
  %v132 = vadd.f32 %v130, %v114
  %133 = vst [vmem:[#allocation2] sm:$0xff] %v131
  %134 = vst [vmem:[#allocation2 + $0x8] sm:$0xff] %v132
  %s135 = scalar_lea.vmem [#allocation2], 16
  %v136 = vld [vmem:[%s135] sm:$0xff]
  %v137 = vld [vmem:[%s135 + $0x8] sm:$0xff]
  %v138 = vadd.f32 %v136, %v115
  %v139 = vadd.f32 %v137, %v116
  %140 = vst [vmem:[%s135] sm:$0xff] %v138
  %141 = vst [vmem:[%s135 + $0x8] sm:$0xff] %v139
  %s142 = scalar_lea.vmem [#allocation2], 32
  %v143 = vld [vmem:[%s142] sm:$0xff]
  %v144 = vld [vmem:[%s142 + $0x8] sm:$0xff]
  %v145 = vadd.f32 %v143, %v119
  %v146 = vadd.f32 %v144, %v120
  %147 = vst [vmem:[%s142] sm:$0xff] %v145
  %148 = vst [vmem:[%s142 + $0x8] sm:$0xff] %v146
  %s149 = scalar_lea.vmem [#allocation2], 48
  %v150 = vld [vmem:[%s149] sm:$0xff]
  %v151 = vld [vmem:[%s149 + $0x8] sm:$0xff]
  %v152 = vadd.f32 %v150, %v123
  %v153 = vadd.f32 %v151, %v124
  %154 = vst [vmem:[%s149] sm:$0xff] %v152
  %155 = vst [vmem:[%s149 + $0x8] sm:$0xff] %v153
  %s156 = scalar_lea.vmem [#allocation2], 64
  %v157 = vld [vmem:[%s156] sm:$0xff]
  %v158 = vld [vmem:[%s156 + $0x8] sm:$0xff]
  %v159 = vadd.f32 %v157, %v127
  %v160 = vadd.f32 %v158, %v128
  %161 = vst [vmem:[%s156] sm:$0xff] %v159
  %162 = vst [vmem:[%s156 + $0x8] sm:$0xff] %v160
  // Predicated region
  $region14: #{neg_pearson_loss.1} parent=0 // pred_check
    %p163 = pneg %p55
  $region15: #{neg_pearson_loss.1} parent=0 // pred_check_branch
    %165 = sbr.rel (%p163) target = $region17
  $region16: #{neg_pearson_loss.1} parent=0 // pred_region
    %vm166 = vcmask 64512
    %167 = vst.msk [vmem:[%s2] sm:$0xff] %vm166, 0.0
    %168 = vst.msk [vmem:[%s2 + $0x8] sm:$0xff] %vm166, 0.0
    %v169 = vld [vmem:[#allocation2] sm:$0xff]
    %v170 = vld [vmem:[#allocation2 + $0x8] sm:$0xff]
    %171 = vadd.xlane.f32.xlu0 %v169
    %v172 = vpop.xlane.xlu0 %171
    %173 = vadd.xlane.f32.xlu0 %v170
    %v174 = vpop.xlane.xlu0 %173
    %vm175 = vcmask 7168
    %176 = vst.msk [vmem:[%s2] sm:$0xff] %vm175, %v172
    %177 = vst.msk [vmem:[%s2 + $0x8] sm:$0xff] %vm175, %v174
    %v178 = vld [vmem:[%s135] sm:$0xff]
    %v179 = vld [vmem:[%s135 + $0x8] sm:$0xff]
    %180 = vadd.xlane.f32.xlu0 %v178
    %v181 = vpop.xlane.xlu0 %180
    %182 = vadd.xlane.f32.xlu0 %v179
    %v183 = vpop.xlane.xlu0 %182
    %vm184 = vcmask 15368
    %185 = vst.msk [vmem:[%s2] sm:$0xff] %vm184, %v181
    %186 = vst.msk [vmem:[%s2 + $0x8] sm:$0xff] %vm184, %v183
    %v187 = vld [vmem:[%s142] sm:$0xff]
    %v188 = vld [vmem:[%s142 + $0x8] sm:$0xff]
    %189 = vadd.xlane.f32.xlu0 %v187
    %v190 = vpop.xlane.xlu0 %189
    %191 = vadd.xlane.f32.xlu0 %v188
    %v192 = vpop.xlane.xlu0 %191
    %vm193 = vcmask 23568
    %194 = vst.msk [vmem:[%s2] sm:$0xff] %vm193, %v190
    %195 = vst.msk [vmem:[%s2 + $0x8] sm:$0xff] %vm193, %v192
    %v196 = vld [vmem:[%s149] sm:$0xff]
    %v197 = vld [vmem:[%s149 + $0x8] sm:$0xff]
    %198 = vadd.xlane.f32.xlu0 %v196
    %v199 = vpop.xlane.xlu0 %198
    %200 = vadd.xlane.f32.xlu0 %v197
    %v201 = vpop.xlane.xlu0 %200
    %vm202 = vcmask 31768
    %203 = vst.msk [vmem:[%s2] sm:$0xff] %vm202, %v199
    %204 = vst.msk [vmem:[%s2 + $0x8] sm:$0xff] %vm202, %v201
    %v205 = vld [vmem:[%s156] sm:$0xff]
    %v206 = vld [vmem:[%s156 + $0x8] sm:$0xff]
    %207 = vadd.xlane.f32.xlu0 %v205
    %v208 = vpop.xlane.xlu0 %207
    %209 = vadd.xlane.f32.xlu0 %v206
    %v210 = vpop.xlane.xlu0 %209
    %vm211 = vcmask 39968
    %212 = vst.msk [vmem:[%s2] sm:$0xff] %vm211, %v208
    %213 = vst.msk [vmem:[%s2 + $0x8] sm:$0xff] %vm211, %v210
  $region17: #{neg_pearson_loss.1} parent=0 // pred_fallthru
    _
  // Predicated region
  $region18: #{neg_pearson_loss.1} parent=0 // pred_check
    _
  $region19: #{neg_pearson_loss.1} parent=0 // pred_check_branch
    %215 = sbr.rel (0) target = $region21
  $region20: #{neg_pearson_loss.1} parent=0 // pred_region
    _
  $region21: #{neg_pearson_loss.1} parent=0 // pred_fallthru
    _
  // Predicated region
  $region22: #{neg_pearson_loss.1} parent=0 // pred_check
    _
  $region23: #{neg_pearson_loss.1} parent=0 // pred_check_branch
    %217 = sbr.rel (0) target = $region25
  $region24: #{neg_pearson_loss.1} parent=0 // pred_region
    _
  $region25: #{neg_pearson_loss.1} parent=0 // pred_fallthru
    _

</llo_original>
